<compile_context>
chip_gen: v6e
topology: v6e:2x2x1
jax: 0.10.0
libtpu: 0.0.40
codegen_flags: <defaults>
</compile_context>

<pallas_src>
import functools

import jax
import jax.numpy as jnp
from jax.experimental import pallas as pl
from jax.experimental.pallas import tpu as pltpu

MIB = 1024 * 1024


def _round_up(x, m):
    return ((x + m - 1) // m) * m


def _pick_tile(n_pad, cap):
    """Largest tile in {1024,512,256,128} that divides n_pad and is <= cap."""
    for t in (1024, 512, 256, 128):
        if t <= cap and n_pad % t == 0:
            return t
    return 128


def _pad2(a, rows, cols):
    if rows == 0 and cols == 0:
        return a          # keep padding a true no-op for 128-multiple N
    return jnp.pad(a, ((0, rows), (0, cols)))


# ---------------------------------------------------------------------------
# Fused single-launch path (small N): everything lives in VMEM.
#   coef_v     = coef - diag(diag(coef))
#   x_v_rec    = coef_v @ x_v
#   coef_v_rec = coef_fusion @ coef_v
# ---------------------------------------------------------------------------
def _fused_kernel(coef_ref, fusion_ref, x_ref, coefv_ref, xrec_ref, coefrec_ref):
    n = coef_ref.shape[0]
    r = jax.lax.broadcasted_iota(jnp.int32, (n, n), 0)
    c = jax.lax.broadcasted_iota(jnp.int32, (n, n), 1)
    coefv = jnp.where(r == c, 0.0, coef_ref[...])
    coefv_ref[...] = coefv
    xrec_ref[...] = jnp.dot(coefv, x_ref[...], preferred_element_type=jnp.float32)
    coefrec_ref[...] = jnp.dot(fusion_ref[...], coefv,
                               preferred_element_type=jnp.float32)


# ---------------------------------------------------------------------------
# Tiled pass 1: coef_v = coef with zeroed diagonal (masked only on i == k tiles)
#               x_v_rec = coef_v @ x_v
# grid = (row-blocks i [parallel], reduction-blocks k [arbitrary, innermost]).
# coef is read from HBM exactly once; the masked tile is reused straight out of
# the coef_v output VMEM buffer as the matmul LHS.  x_v is VMEM-resident (loaded
# once for the whole grid) when small enough; xrec accumulates directly into the
# f32 output block (resident across k), no scratch.
# ---------------------------------------------------------------------------
def _mask_and_xrec_kernel(coef_ref, x_ref, coefv_ref, xrec_ref, *, x_resident):
    i = pl.program_id(0)
    k = pl.program_id(1)
    blk = coef_ref.shape[0]

    coefv_ref[...] = coef_ref[...]

    @pl.when(i == k)
    def _():
        r = jax.lax.broadcasted_iota(jnp.int32, coef_ref.shape, 0)
        c = jax.lax.broadcasted_iota(jnp.int32, coef_ref.shape, 1)
        coefv_ref[...] = jnp.where(r == c, 0.0, coef_ref[...])

    @pl.when(k == 0)
    def _():
        xrec_ref[...] = jnp.zeros_like(xrec_ref)

    if x_resident:
        row0 = pl.multiple_of(k * blk, blk)
        x_blk = x_ref[pl.ds(row0, blk), :]
    else:
        x_blk = x_ref[...]

    xrec_ref[...] += jnp.dot(coefv_ref[...], x_blk,
                             preferred_element_type=jnp.float32)


# ---------------------------------------------------------------------------
# Tiled pass 2: coef_v_rec = coef_fusion @ coef_v.  Standard MXU matmul, large
# (tm, tn) tiles to cut HBM re-reads; accumulate directly into the f32 output.
# ---------------------------------------------------------------------------
def _fusion_matmul_kernel(a_ref, b_ref, o_ref):
    @pl.when(pl.program_id(2) == 0)
    def _():
        o_ref[...] = jnp.zeros_like(o_ref)

    o_ref[...] += jnp.dot(a_ref[...], b_ref[...],
                          preferred_element_type=jnp.float32)


def single_view_contrastive_clustering_forward(x_v, coef_fusion, coef_param,
                                               *, force_path=None):
    """Forward of single_view_contrastive_clustering.

    coef_v     = coef_param - diag(diag(coef_param))
    x_v_rec    = coef_v @ x_v
    coef_v_rec = coef_fusion @ coef_v
    Returns (x_v_rec, coef_v, coef_v_rec).
    """
    n, d = x_v.shape
    assert coef_param.shape == (n, n)
    assert coef_fusion.shape == (n, n)
    f32 = jnp.float32

    n_pad = _round_up(n, 128)                       # no-op pad when n % 128 == 0
    d_pad = max(128, _round_up(d, 128))             # lane-dense feature dim

    coef_p = _pad2(coef_param.astype(f32), n_pad - n, n_pad - n)
    fusion_p = _pad2(coef_fusion.astype(f32), n_pad - n, n_pad - n)
    x_p = _pad2(x_v.astype(f32), n_pad - n, d_pad - d)

    # ------------------------- fused small-problem path ---------------------
    # double-buffered f32 working set: coef, fusion, coefv, coefrec (N^2 each)
    # plus x and xrec (N*d_pad each).
    fused_bytes = 8 * (4 * n_pad * n_pad + 2 * n_pad * d_pad)
    use_fused = (n_pad <= 1024) and (fused_bytes <= 44 * MIB)
    if force_path == "fused":
        use_fused = True
    elif force_path == "tiled":
        use_fused = False

    if use_fused:
        coefv_p, xrec_p, coefrec_p = pl.pallas_call(
            _fused_kernel,
            out_shape=(jax.ShapeDtypeStruct((n_pad, n_pad), f32),
                       jax.ShapeDtypeStruct((n_pad, d_pad), f32),
                       jax.ShapeDtypeStruct((n_pad, n_pad), f32)),
            grid=(1,),
            in_specs=[pl.BlockSpec((n_pad, n_pad), lambda i: (0, 0)),
                      pl.BlockSpec((n_pad, n_pad), lambda i: (0, 0)),
                      pl.BlockSpec((n_pad, d_pad), lambda i: (0, 0))],
            out_specs=(pl.BlockSpec((n_pad, n_pad), lambda i: (0, 0)),
                       pl.BlockSpec((n_pad, d_pad), lambda i: (0, 0)),
                       pl.BlockSpec((n_pad, n_pad), lambda i: (0, 0))),
            compiler_params=pltpu.CompilerParams(
                dimension_semantics=("arbitrary",),
                vmem_limit_bytes=min(max(fused_bytes + 4 * MIB, 32 * MIB),
                                     56 * MIB)),
            cost_estimate=pl.CostEstimate(
                flops=2 * n_pad * n_pad * (n_pad + d_pad),
                transcendentals=0,
                bytes_accessed=4 * (4 * n_pad * n_pad + 2 * n_pad * d_pad)),
        )(coef_p, fusion_p, x_p)
        return xrec_p[:n, :d], coefv_p[:n, :n], coefrec_p[:n, :n]

    # ------------------------------ tiled path ------------------------------
    # ---- pass 1: diagonal masking + coef_v @ x_v ---------------------------
    blk = _pick_tile(n_pad, 512)
    gn = n_pad // blk

    x_block_bytes = 2 * 4 * n_pad * d_pad           # resident x, double-buffered
    x_resident = x_block_bytes <= 16 * MIB
    if x_resident:
        x_spec = pl.BlockSpec((n_pad, d_pad), lambda i, k: (0, 0))
        x_bytes = x_block_bytes
    else:
        x_spec = pl.BlockSpec((blk, d_pad), lambda i, k: (k, 0))
        x_bytes = 2 * 4 * blk * d_pad

    p1_bytes = 4 * (2 * blk * blk            # coef in (double buffered)
                    + 2 * blk * blk          # coef_v out
                    + 2 * blk * d_pad) + x_bytes
    coefv_p, xrec_p = pl.pallas_call(
        functools.partial(_mask_and_xrec_kernel, x_resident=x_resident),
        out_shape=(jax.ShapeDtypeStruct((n_pad, n_pad), f32),
                   jax.ShapeDtypeStruct((n_pad, d_pad), f32)),
        grid=(gn, gn),
        in_specs=[pl.BlockSpec((blk, blk), lambda i, k: (i, k)),
                  x_spec],
        out_specs=(pl.BlockSpec((blk, blk), lambda i, k: (i, k)),
                   pl.BlockSpec((blk, d_pad), lambda i, k: (i, 0))),
        compiler_params=pltpu.CompilerParams(
            dimension_semantics=("parallel", "arbitrary"),
            vmem_limit_bytes=min(max(2 * p1_bytes, 32 * MIB), 56 * MIB)),
        cost_estimate=pl.CostEstimate(
            flops=2 * n_pad * n_pad * d_pad,
            transcendentals=0,
            bytes_accessed=4 * (2 * n_pad * n_pad
                                + (1 if x_resident else gn) * n_pad * d_pad
                                + n_pad * d_pad)),
    )(coef_p, x_p)

    # ---- pass 2: coef_fusion @ coef_v (coef_v already masked) --------------
    # Prefer large tm/tn (cuts HBM re-reads) over tk (only step count).
    tm = tn = _pick_tile(n_pad, 1024)
    tk = _pick_tile(n_pad, 512)
    gm, gj, gk = n_pad // tm, n_pad // tn, n_pad // tk

    p2_bytes = 2 * 4 * (tm * tk + tk * tn + tm * tn)     # double-buffered tiles
    coefrec_p = pl.pallas_call(
        _fusion_matmul_kernel,
        out_shape=jax.ShapeDtypeStruct((n_pad, n_pad), f32),
        grid=(gm, gj, gk),
        in_specs=[pl.BlockSpec((tm, tk), lambda i, j, k: (i, k)),
                  pl.BlockSpec((tk, tn), lambda i, j, k: (k, j))],
        out_specs=pl.BlockSpec((tm, tn), lambda i, j, k: (i, j)),
        compiler_params=pltpu.CompilerParams(
            dimension_semantics=("parallel", "parallel", "arbitrary"),
            vmem_limit_bytes=min(max(2 * p2_bytes, 32 * MIB), 56 * MIB)),
        cost_estimate=pl.CostEstimate(
            flops=2 * n_pad ** 3,
            transcendentals=0,
            bytes_accessed=4 * (gj * n_pad * n_pad + gm * n_pad * n_pad
                                + n_pad * n_pad)),
    )(fusion_p, coefv_p)

    # TODO(synk): optional bf16-operand / f32-accumulate variant for the pass-2
    # MXU (4x rate on v6e/v7x, half the re-read bytes); kept f32 because coef is
    # O(1e-4) and the 1e-4 reference tolerance must hold unconditionally.
    return xrec_p[:n, :d], coefv_p[:n, :n], coefrec_p[:n, :n]


if __name__ == "__main__":
    def _reference(x_v, coef_fusion, coef_param):
        coef_v = coef_param - jnp.diag(jnp.diag(coef_param))
        return coef_v @ x_v, coef_v, coef_fusion @ coef_v

    key = jax.random.PRNGKey(0)
    k1, k2, k3, k4, k5 = jax.random.split(key, 5)

    # ---- small demo shape (exercises the fused single-launch path) ---------
    n_samples, feat_dim = 128, 32
    # Deterministic parameter init, exactly as in the module __init__.
    coef_param = 0.0001 * jnp.ones((n_samples, n_samples), dtype=jnp.float32)
    x_v = jax.random.normal(k1, (n_samples, feat_dim), dtype=jnp.float32)
    coef_fusion = jax.random.normal(k2, (n_samples, n_samples), dtype=jnp.float32)

    x_rec, coef_v, coef_rec = single_view_contrastive_clustering_forward(
        x_v, coef_fusion, coef_param)
    jax.block_until_ready((x_rec, coef_v, coef_rec))

    x_rec_r, coef_v_r, coef_rec_r = _reference(x_v, coef_fusion, coef_param)
    assert jnp.allclose(coef_v, coef_v_r, atol=1e-6)
    assert jnp.allclose(x_rec, x_rec_r, atol=1e-4)
    assert jnp.allclose(coef_rec, coef_rec_r, atol=1e-4)

    # ---- small non-power-of-two N (exercises the tiled multi-block path) ---
    n2, d2 = 384, 48
    coef2 = 0.0001 * jax.random.normal(k3, (n2, n2), dtype=jnp.float32)
    x2 = jax.random.normal(k4, (n2, d2), dtype=jnp.float32)
    fusion2 = jax.random.normal(k5, (n2, n2), dtype=jnp.float32)

    x_rec2, coef_v2, coef_rec2 = single_view_contrastive_clustering_forward(
        x2, fusion2, coef2, force_path="tiled")
    jax.block_until_ready((x_rec2, coef_v2, coef_rec2))

    x_rec2_r, coef_v2_r, coef_rec2_r = _reference(x2, fusion2, coef2)
    assert jnp.allclose(coef_v2, coef_v2_r, atol=1e-6)
    assert jnp.allclose(x_rec2, x_rec2_r, atol=1e-4)
    assert jnp.allclose(coef_rec2, coef_rec2_r, atol=1e-4)

    print("KERNEL_OK")
</pallas_src>

<mosaic_0001>
module attributes {stable_mosaic.version = 11 : i64} {
  func.func @_fused_kernel(%arg0: i32, %arg1: memref<128x128xf32, #tpu.memory_space<vmem>>, %arg2: memref<128x128xf32, #tpu.memory_space<vmem>>, %arg3: memref<128x128xf32, #tpu.memory_space<vmem>>, %arg4: memref<128x128xf32, #tpu.memory_space<vmem>>, %arg5: memref<128x128xf32, #tpu.memory_space<vmem>>, %arg6: memref<128x128xf32, #tpu.memory_space<vmem>>) attributes {dimension_semantics = [#tpu.dimension_semantics<arbitrary>], iteration_bounds = array<i64: 1>, scalar_prefetch = 0 : i64, scratch_operands = 0 : i64, tpu.core_type = #tpu.core_type<tc>, window_params = [{pipeline_mode = #tpu.pipeline_mode<synchronous>, transform_indices = @transform_0, window_bounds = array<i64: 128, 128>}, {pipeline_mode = #tpu.pipeline_mode<synchronous>, transform_indices = @transform_1, window_bounds = array<i64: 128, 128>}, {pipeline_mode = #tpu.pipeline_mode<synchronous>, transform_indices = @transform_2, window_bounds = array<i64: 128, 128>}, {pipeline_mode = #tpu.pipeline_mode<synchronous>, transform_indices = @transform_3, window_bounds = array<i64: 128, 128>}, {pipeline_mode = #tpu.pipeline_mode<synchronous>, transform_indices = @transform_4, window_bounds = array<i64: 128, 128>}, {pipeline_mode = #tpu.pipeline_mode<synchronous>, transform_indices = @transform_5, window_bounds = array<i64: 128, 128>}]} {
    %0 = tpu.iota {dimensions = array<i32: 0>} : vector<128x128xi32>
    %1 = tpu.iota {dimensions = array<i32: 1>} : vector<128x128xi32>
    %2 = arith.cmpi eq, %0, %1 : vector<128x128xi32>
    %c0 = arith.constant 0 : index
    %c0_0 = arith.constant 0 : index
    %3 = vector.load %arg1[%c0, %c0_0] : memref<128x128xf32, #tpu.memory_space<vmem>>, vector<128x128xf32>
    %cst = arith.constant 0.000000e+00 : f32
    %4 = vector.broadcast %cst : f32 to vector<128x128xf32>
    %5 = arith.select %2, %4, %3 : vector<128x128xi1>, vector<128x128xf32>
    %c0_1 = arith.constant 0 : index
    %c0_2 = arith.constant 0 : index
    %6 = vector.load %arg4[%c0_1, %c0_2] : memref<128x128xf32, #tpu.memory_space<vmem>>, vector<128x128xf32>
    tpu.vector_store %arg4[%c0_1, %c0_2], %5 {strides = array<i32>} : memref<128x128xf32, #tpu.memory_space<vmem>>, vector<128x128xf32>,
    %c0_3 = arith.constant 0 : index
    %c0_4 = arith.constant 0 : index
    %7 = vector.load %arg3[%c0_3, %c0_4] : memref<128x128xf32, #tpu.memory_space<vmem>>, vector<128x128xf32>
    %cst_5 = arith.constant dense<0.000000e+00> : vector<128x128xf32>
    %8 = tpu.matmul %5, %7, %cst_5 {dimension_numbers = #tpu.dot_dimension_numbers<[1], [0], [0], [1], [0, 0, 1, 1], [], []>} : vector<128x128xf32>, vector<128x128xf32>, vector<128x128xf32> -> vector<128x128xf32>
    %c0_6 = arith.constant 0 : index
    %c0_7 = arith.constant 0 : index
    %9 = vector.load %arg5[%c0_6, %c0_7] : memref<128x128xf32, #tpu.memory_space<vmem>>, vector<128x128xf32>
    tpu.vector_store %arg5[%c0_6, %c0_7], %8 {strides = array<i32>} : memref<128x128xf32, #tpu.memory_space<vmem>>, vector<128x128xf32>,
    %c0_8 = arith.constant 0 : index
    %c0_9 = arith.constant 0 : index
    %10 = vector.load %arg2[%c0_8, %c0_9] : memref<128x128xf32, #tpu.memory_space<vmem>>, vector<128x128xf32>
    %cst_10 = arith.constant dense<0.000000e+00> : vector<128x128xf32>
    %11 = tpu.matmul %10, %5, %cst_10 {dimension_numbers = #tpu.dot_dimension_numbers<[1], [0], [0], [1], [0, 0, 1, 1], [], []>} : vector<128x128xf32>, vector<128x128xf32>, vector<128x128xf32> -> vector<128x128xf32>
    %c0_11 = arith.constant 0 : index
    %c0_12 = arith.constant 0 : index
    %12 = vector.load %arg6[%c0_11, %c0_12] : memref<128x128xf32, #tpu.memory_space<vmem>>, vector<128x128xf32>
    tpu.vector_store %arg6[%c0_11, %c0_12], %11 {strides = array<i32>} : memref<128x128xf32, #tpu.memory_space<vmem>>, vector<128x128xf32>,
    return
  }
  func.func @transform_0(%arg0: i32) -> (i32, i32) {
    %c0_i32 = arith.constant 0 : i32
    %c0_i32_0 = arith.constant 0 : i32
    %c0_i32_1 = arith.constant 0 : i32
    return %c0_i32, %c0_i32_0 : i32, i32
  }
  func.func @transform_1(%arg0: i32) -> (i32, i32) {
    %c0_i32 = arith.constant 0 : i32
    %c0_i32_0 = arith.constant 0 : i32
    %c0_i32_1 = arith.constant 0 : i32
    return %c0_i32, %c0_i32_0 : i32, i32
  }
  func.func @transform_2(%arg0: i32) -> (i32, i32) {
    %c0_i32 = arith.constant 0 : i32
    %c0_i32_0 = arith.constant 0 : i32
    %c0_i32_1 = arith.constant 0 : i32
    return %c0_i32, %c0_i32_0 : i32, i32
  }
  func.func @transform_3(%arg0: i32) -> (i32, i32) {
    %c0_i32 = arith.constant 0 : i32
    %c0_i32_0 = arith.constant 0 : i32
    %c0_i32_1 = arith.constant 0 : i32
    return %c0_i32, %c0_i32_0 : i32, i32
  }
  func.func @transform_4(%arg0: i32) -> (i32, i32) {
    %c0_i32 = arith.constant 0 : i32
    %c0_i32_0 = arith.constant 0 : i32
    %c0_i32_1 = arith.constant 0 : i32
    return %c0_i32, %c0_i32_0 : i32, i32
  }
  func.func @transform_5(%arg0: i32) -> (i32, i32) {
    %c0_i32 = arith.constant 0 : i32
    %c0_i32_0 = arith.constant 0 : i32
    %c0_i32_1 = arith.constant 0 : i32
    return %c0_i32, %c0_i32_0 : i32, i32
  }
}

</mosaic_0001>

<llo_original>
// kernel: tpu_custom_call.1
$region0: #{tpu_custom_call.1}
  #allocation0 [shape = 'u32[]', space=smem, size = 0x4, offset = 0x4, fixed_abs, tag = 'smem constant byte address 0x4 - core index']
  #allocation1 [shape = 'u32[144,128]{1,0:T(1,128)}', space=vmem, size = 0x12000, scoped, tag = 'internal scratch']
  %s0 = inlined_call_operand.hbm [shape: f32[128,128], index: 0, kind: input, shape index: {}]
  %s1 = inlined_call_operand.hbm [shape: f32[128,128], index: 1, kind: input, shape index: {}]
  %s2 = inlined_call_operand.hbm [shape: f32[128,128], index: 2, kind: input, shape index: {}]
  %s3 = inlined_call_operand.hbm [shape: f32[128,128], index: 3, kind: output, shape index: {0}]
  %s4 = inlined_call_operand.hbm [shape: f32[128,128], index: 4, kind: output, shape index: {1}]
  %s5 = inlined_call_operand.hbm [shape: f32[128,128], index: 5, kind: output, shape index: {2}]
  %6 = xla_tuple %s3, %s4, %s5
  %s7 = sld [smem:[#allocation0]]
  $region50: #{tpu_custom_call.1} parent=0
    _
  %s9 = ssub.s32 1, %s7
  %s10 = scalar_select 0, %s9, %s7
  $region1: #{tpu_custom_call.1} parent=0
    #allocation2 [shape = 'u8[65536]{0}', space=vmem, size = 0x10000, scoped, tag = 'input window, operand 0, single buffered']
    #allocation3 [shape = 's32[1]{0}', space=sflag, size = 0x4, scoped, tag = 'scoped memory for tpu_custom_call.1']
    #allocation4 [shape = 's32[1]{0}', space=sflag, size = 0x4, scoped, tag = 'scoped memory for tpu_custom_call.1']
    #allocation5 [shape = 'u8[65536]{0}', space=vmem, size = 0x10000, scoped, tag = 'input window, operand 1, single buffered']
    #allocation6 [shape = 's32[1]{0}', space=sflag, size = 0x4, scoped, tag = 'scoped memory for tpu_custom_call.1']
    #allocation7 [shape = 'u8[65536]{0}', space=vmem, size = 0x10000, scoped, tag = 'input window, operand 2, single buffered']
    #allocation8 [shape = 'u8[65536]{0}', space=vmem, size = 0x10000, scoped, tag = 'output window, operand 0, single buffered']
    #allocation9 [shape = 'u8[65536]{0}', space=vmem, size = 0x10000, scoped, tag = 'output window, operand 1, single buffered']
    #allocation10 [shape = 's32[1]{0}', space=sflag, size = 0x4, scoped, tag = 'scoped memory for tpu_custom_call.1']
    #allocation11 [shape = 'u8[65536]{0}', space=vmem, size = 0x10000, scoped, tag = 'output window, operand 2, single buffered']
    %11 = vsyncpa [#allocation3], 0
    %12 = vsyncpa [#allocation6], 0
    %13 = vsyncpa [#allocation4], 0
    %14 = vsyncpa [#allocation10], 0
    // Predicated region
    $region2: #{tpu_custom_call.1} parent=1 // pred_check
      _
    $region3: #{tpu_custom_call.1} parent=1 // pred_check_branch
      %16 = sbr.rel (0) target = $region5
    $region4: #{tpu_custom_call.1} parent=1 // pred_region
      %s18 = ssub.s32 2048, 2048
      %19 = vsyncadd [#allocation3], %s18
      %s20 = sshll.u32 [#allocation2], 4
      %s21 = int_to_ptr.vmem [resolvable:$true] %s20
      %26 = dma.hbm_to_vmem [thread:$0]  %s0, 2048, %s21, [#allocation3], 128, 128, 8
    $region5: #{tpu_custom_call.1} parent=1 // pred_fallthru
      _
    // Predicated region
    $region6: #{tpu_custom_call.1} parent=1 // pred_check
      _
    $region7: #{tpu_custom_call.1} parent=1 // pred_check_branch
      %28 = sbr.rel (0) target = $region9
    $region8: #{tpu_custom_call.1} parent=1 // pred_region
      %s30 = ssub.s32 2048, 2048
      %31 = vsyncadd [#allocation6], %s30
      %s32 = sshll.u32 [#allocation5], 4
      %s33 = int_to_ptr.vmem [resolvable:$true] %s32
      %38 = dma.hbm_to_vmem [thread:$0]  %s1, 2048, %s33, [#allocation6], 128, 128, 8
    $region9: #{tpu_custom_call.1} parent=1 // pred_fallthru
      _
    // Predicated region
    $region10: #{tpu_custom_call.1} parent=1 // pred_check
      _
    $region11: #{tpu_custom_call.1} parent=1 // pred_check_branch
      %40 = sbr.rel (0) target = $region13
    $region12: #{tpu_custom_call.1} parent=1 // pred_region
      %s42 = ssub.s32 2048, 2048
      %43 = vsyncadd [#allocation6], %s42
      %s44 = sshll.u32 [#allocation7], 4
      %s45 = int_to_ptr.vmem [resolvable:$true] %s44
      %50 = dma.hbm_to_vmem [thread:$0]  %s2, 2048, %s45, [#allocation6], 128, 128, 8
    $region13: #{tpu_custom_call.1} parent=1 // pred_fallthru
      _
    // Predicated region
    $region14: #{tpu_custom_call.1} parent=1 // pred_check
      _
    $region15: #{tpu_custom_call.1} parent=1 // pred_check_branch
      %52 = sbr.rel (0) target = $region17
    $region16: #{tpu_custom_call.1} parent=1 // pred_region
      %53 = dma.done [#allocation3], 2048
    $region17: #{tpu_custom_call.1} parent=1 // pred_fallthru
      _
    // Predicated region
    $region18: #{tpu_custom_call.1} parent=1 // pred_check
      _
    $region19: #{tpu_custom_call.1} parent=1 // pred_check_branch
      %55 = sbr.rel (0) target = $region21
    $region20: #{tpu_custom_call.1} parent=1 // pred_region
      %56 = dma.done [#allocation6], 2048
    $region21: #{tpu_custom_call.1} parent=1 // pred_fallthru
      _
    // Predicated region
    $region22: #{tpu_custom_call.1} parent=1 // pred_check
      _
    $region23: #{tpu_custom_call.1} parent=1 // pred_check_branch
      %58 = sbr.rel (0) target = $region25
    $region24: #{tpu_custom_call.1} parent=1 // pred_region
      %59 = dma.done [#allocation6], 2048
    $region25: #{tpu_custom_call.1} parent=1 // pred_fallthru
      _
    %v60 = vlaneseq
    %v61 = vshrl.u32 %v60, 7
    %v62 = vadd.s32 %v61, 8
    %v63 = vadd.s32 %v61, 16
    %v64 = vadd.s32 %v61, 24
    %v65 = vadd.s32 %v61, 32
    %v66 = vadd.s32 %v61, 40
    %v67 = vadd.s32 %v61, 48
    %v68 = vadd.s32 %v61, 56
    %v69 = vadd.s32 %v61, 64
    %v70 = vadd.s32 %v61, 72
    %v71 = vadd.s32 %v61, 80
    %v72 = vadd.s32 %v61, 88
    %v73 = vadd.s32 %v61, 96
    %v74 = vadd.s32 %v61, 104
    %v75 = vadd.s32 %v61, 112
    %v76 = vadd.s32 %v61, 120
    %v77 = vlaneseq
    %v78 = vand.u32 %v77, 127
    %vm79 = vcmp.eq.s32.totalorder %v61, %v78
    %vm80 = vcmp.eq.s32.totalorder %v62, %v78
    %vm81 = vcmp.eq.s32.totalorder %v63, %v78
    %vm82 = vcmp.eq.s32.totalorder %v64, %v78
    %vm83 = vcmp.eq.s32.totalorder %v65, %v78
    %vm84 = vcmp.eq.s32.totalorder %v66, %v78
    %vm85 = vcmp.eq.s32.totalorder %v67, %v78
    %vm86 = vcmp.eq.s32.totalorder %v68, %v78
    %vm87 = vcmp.eq.s32.totalorder %v69, %v78
    %vm88 = vcmp.eq.s32.totalorder %v70, %v78
    %vm89 = vcmp.eq.s32.totalorder %v71, %v78
    %vm90 = vcmp.eq.s32.totalorder %v72, %v78
    %vm91 = vcmp.eq.s32.totalorder %v73, %v78
    %vm92 = vcmp.eq.s32.totalorder %v74, %v78
    %vm93 = vcmp.eq.s32.totalorder %v75, %v78
    %vm94 = vcmp.eq.s32.totalorder %v76, %v78
    %v95 = vld [vmem:[#allocation2] sm:$0xff]
    %v96 = vld [vmem:[#allocation2 + $0x8] sm:$0xff]
    %v97 = vld [vmem:[#allocation2 + $0x10] sm:$0xff]
    %v98 = vld [vmem:[#allocation2 + $0x18] sm:$0xff]
    %v99 = vld [vmem:[#allocation2 + $0x20] sm:$0xff]
    %v100 = vld [vmem:[#allocation2 + $0x28] sm:$0xff]
    %v101 = vld [vmem:[#allocation2 + $0x30] sm:$0xff]
    %v102 = vld [vmem:[#allocation2 + $0x38] sm:$0xff]
    %v103 = vld [vmem:[#allocation2 + $0x40] sm:$0xff]
    %v104 = vld [vmem:[#allocation2 + $0x48] sm:$0xff]
    %v105 = vld [vmem:[#allocation2 + $0x50] sm:$0xff]
    %v106 = vld [vmem:[#allocation2 + $0x58] sm:$0xff]
    %v107 = vld [vmem:[#allocation2 + $0x60] sm:$0xff]
    %v108 = vld [vmem:[#allocation2 + $0x68] sm:$0xff]
    %v109 = vld [vmem:[#allocation2 + $0x70] sm:$0xff]
    %v110 = vld [vmem:[#allocation2 + $0x78] sm:$0xff]
    %v111 = vsel %vm79, 0.0, %v95
    %v112 = vsel %vm80, 0.0, %v96
    %v113 = vsel %vm81, 0.0, %v97
    %v114 = vsel %vm82, 0.0, %v98
    %v115 = vsel %vm83, 0.0, %v99
    %v116 = vsel %vm84, 0.0, %v100
    %v117 = vsel %vm85, 0.0, %v101
    %v118 = vsel %vm86, 0.0, %v102
    %v119 = vsel %vm87, 0.0, %v103
    %v120 = vsel %vm88, 0.0, %v104
    %v121 = vsel %vm89, 0.0, %v105
    %v122 = vsel %vm90, 0.0, %v106
    %v123 = vsel %vm91, 0.0, %v107
    %v124 = vsel %vm92, 0.0, %v108
    %v125 = vsel %vm93, 0.0, %v109
    %v126 = vsel %vm94, 0.0, %v110
    %127 = vst [vmem:[#allocation8] sm:$0xff] %v111
    %128 = vst [vmem:[#allocation8 + $0x8] sm:$0xff] %v112
    %129 = vst [vmem:[#allocation8 + $0x10] sm:$0xff] %v113
    %130 = vst [vmem:[#allocation8 + $0x18] sm:$0xff] %v114
    %131 = vst [vmem:[#allocation8 + $0x20] sm:$0xff] %v115
    %132 = vst [vmem:[#allocation8 + $0x28] sm:$0xff] %v116
    %133 = vst [vmem:[#allocation8 + $0x30] sm:$0xff] %v117
    %134 = vst [vmem:[#allocation8 + $0x38] sm:$0xff] %v118
    %135 = vst [vmem:[#allocation8 + $0x40] sm:$0xff] %v119
    %136 = vst [vmem:[#allocation8 + $0x48] sm:$0xff] %v120
    %137 = vst [vmem:[#allocation8 + $0x50] sm:$0xff] %v121
    %138 = vst [vmem:[#allocation8 + $0x58] sm:$0xff] %v122
    %139 = vst [vmem:[#allocation8 + $0x60] sm:$0xff] %v123
    %140 = vst [vmem:[#allocation8 + $0x68] sm:$0xff] %v124
    %141 = vst [vmem:[#allocation8 + $0x70] sm:$0xff] %v125
    %142 = vst [vmem:[#allocation8 + $0x78] sm:$0xff] %v126
    %v143 = vld [vmem:[#allocation7] sm:$0xff]
    %v144 = vld [vmem:[#allocation7 + $0x8] sm:$0xff]
    %v145 = vld [vmem:[#allocation7 + $0x10] sm:$0xff]
    %v146 = vld [vmem:[#allocation7 + $0x18] sm:$0xff]
    %v147 = vld [vmem:[#allocation7 + $0x20] sm:$0xff]
    %v148 = vld [vmem:[#allocation7 + $0x28] sm:$0xff]
    %v149 = vld [vmem:[#allocation7 + $0x30] sm:$0xff]
    %v150 = vld [vmem:[#allocation7 + $0x38] sm:$0xff]
    %v151 = vld [vmem:[#allocation7 + $0x40] sm:$0xff]
    %v152 = vld [vmem:[#allocation7 + $0x48] sm:$0xff]
    %v153 = vld [vmem:[#allocation7 + $0x50] sm:$0xff]
    %v154 = vld [vmem:[#allocation7 + $0x58] sm:$0xff]
    %v155 = vld [vmem:[#allocation7 + $0x60] sm:$0xff]
    %v156 = vld [vmem:[#allocation7 + $0x68] sm:$0xff]
    %v157 = vld [vmem:[#allocation7 + $0x70] sm:$0xff]
    %v158 = vld [vmem:[#allocation7 + $0x78] sm:$0xff]
    %159 = vmatprep.subr.mxu0 0.0
    %160 = vmatpush1.msra.mxu0 %v158
    %161 = vmatprep.subr.mxu0 0.0
    %162 = vmatpush1.msra.mxu0 %v157
    %163 = vmatprep.subr.mxu0 0.0
    %164 = vmatpush1.msra.mxu0 %v156
    %165 = vmatprep.subr.mxu0 0.0
    %166 = vmatpush1.msra.mxu0 %v155
    %167 = vmatprep.subr.mxu0 0.0
    %168 = vmatpush1.msra.mxu0 %v154
    %169 = vmatprep.subr.mxu0 0.0
    %170 = vmatpush1.msra.mxu0 %v153
    %171 = vmatprep.subr.mxu0 0.0
    %172 = vmatpush1.msra.mxu0 %v152
    %173 = vmatprep.subr.mxu0 0.0
    %174 = vmatpush1.msra.mxu0 %v151
    %175 = vmatprep.subr.mxu0 0.0
    %176 = vmatpush1.msra.mxu0 %v150
    %177 = vmatprep.subr.mxu0 0.0
    %178 = vmatpush1.msra.mxu0 %v149
    %179 = vmatprep.subr.mxu0 0.0
    %180 = vmatpush1.msra.mxu0 %v148
    %181 = vmatprep.subr.mxu0 0.0
    %182 = vmatpush1.msra.mxu0 %v147
    %183 = vmatprep.subr.mxu0 0.0
    %184 = vmatpush1.msra.mxu0 %v146
    %185 = vmatprep.subr.mxu0 0.0
    %186 = vmatpush1.msra.mxu0 %v145
    %187 = vmatprep.subr.mxu0 0.0
    %188 = vmatpush1.msra.mxu0 %v144
    %189 = vmatprep.subr.mxu0 0.0
    %190 = vmatpush1.msra.mxu0 %v143
    %191 = vmatprep.subr.mxu0 0.0
    %192 = vmatpush2.msra.mxu0 0.0
    %193 = vmatprep.subr.mxu0 0.0
    %194 = vmatpush2.msra.mxu0 0.0
    %195 = vmatprep.subr.mxu0 0.0
    %196 = vmatpush2.msra.mxu0 0.0
    %197 = vmatprep.subr.mxu0 0.0
    %198 = vmatpush2.msra.mxu0 0.0
    %199 = vmatprep.subr.mxu0 0.0
    %200 = vmatpush2.msra.mxu0 0.0
    %201 = vmatprep.subr.mxu0 0.0
    %202 = vmatpush2.msra.mxu0 0.0
    %203 = vmatprep.subr.mxu0 0.0
    %204 = vmatpush2.msra.mxu0 0.0
    %205 = vmatprep.subr.mxu0 0.0
    %206 = vmatpush2.msra.mxu0 0.0
    %207 = vmatprep.subr.mxu0 0.0
    %208 = vmatpush2.msra.mxu0 0.0
    %209 = vmatprep.subr.mxu0 0.0
    %210 = vmatpush2.msra.mxu0 0.0
    %211 = vmatprep.subr.mxu0 0.0
    %212 = vmatpush2.msra.mxu0 0.0
    %213 = vmatprep.subr.mxu0 0.0
    %214 = vmatpush2.msra.mxu0 0.0
    %215 = vmatprep.subr.mxu0 0.0
    %216 = vmatpush2.msra.mxu0 0.0
    %217 = vmatprep.subr.mxu0 0.0
    %218 = vmatpush2.msra.mxu0 0.0
    %219 = vmatprep.subr.mxu0 0.0
    %220 = vmatpush2.msra.mxu0 0.0
    %221 = vmatprep.subr.mxu0 0.0
    %222 = vmatpush2.msra.mxu0 0.0
    %223 = vmatprep.mubr.f32.mxu0 0.0
    %224 = vmatmul.mubr.f32.gmra.mxu0 %v111
    %v225 = vpop.f32.mrf.mxu0
    %v226 = vadd.f32 0.0, %v225
    %v227 = vpop.f32.mrf.mxu0
    %228 = vmatprep.mubr.f32.mxu0 0.0
    %229 = vmatmul.mubr.f32.gmra.mxu0 %v112
    %v230 = vpop.f32.mrf.mxu0
    %v231 = vadd.f32 0.0, %v230
    %v232 = vpop.f32.mrf.mxu0
    %233 = vmatprep.mubr.f32.mxu0 0.0
    %234 = vmatmul.mubr.f32.gmra.mxu0 %v113
    %v235 = vpop.f32.mrf.mxu0
    %v236 = vadd.f32 0.0, %v235
    %v237 = vpop.f32.mrf.mxu0
    %238 = vmatprep.mubr.f32.mxu0 0.0
    %239 = vmatmul.mubr.f32.gmra.mxu0 %v114
    %v240 = vpop.f32.mrf.mxu0
    %v241 = vadd.f32 0.0, %v240
    %v242 = vpop.f32.mrf.mxu0
    %243 = vmatprep.mubr.f32.mxu0 0.0
    %244 = vmatmul.mubr.f32.gmra.mxu0 %v115
    %v245 = vpop.f32.mrf.mxu0
    %v246 = vadd.f32 0.0, %v245
    %v247 = vpop.f32.mrf.mxu0
    %248 = vmatprep.mubr.f32.mxu0 0.0
    %249 = vmatmul.mubr.f32.gmra.mxu0 %v116
    %v250 = vpop.f32.mrf.mxu0
    %v251 = vadd.f32 0.0, %v250
    %v252 = vpop.f32.mrf.mxu0
    %253 = vmatprep.mubr.f32.mxu0 0.0
    %254 = vmatmul.mubr.f32.gmra.mxu0 %v117
    %v255 = vpop.f32.mrf.mxu0
    %v256 = vadd.f32 0.0, %v255
    %v257 = vpop.f32.mrf.mxu0
    %258 = vmatprep.mubr.f32.mxu0 0.0
    %259 = vmatmul.mubr.f32.gmra.mxu0 %v118
    %v260 = vpop.f32.mrf.mxu0
    %v261 = vadd.f32 0.0, %v260
    %v262 = vpop.f32.mrf.mxu0
    %263 = vmatprep.mubr.f32.mxu0 0.0
    %264 = vmatmul.mubr.f32.gmra.mxu0 %v119
    %v265 = vpop.f32.mrf.mxu0
    %v266 = vadd.f32 0.0, %v265
    %v267 = vpop.f32.mrf.mxu0
    %268 = vmatprep.mubr.f32.mxu0 0.0
    %269 = vmatmul.mubr.f32.gmra.mxu0 %v120
    %v270 = vpop.f32.mrf.mxu0
    %v271 = vadd.f32 0.0, %v270
    %v272 = vpop.f32.mrf.mxu0
    %273 = vmatprep.mubr.f32.mxu0 0.0
    %274 = vmatmul.mubr.f32.gmra.mxu0 %v121
    %v275 = vpop.f32.mrf.mxu0
    %v276 = vadd.f32 0.0, %v275
    %v277 = vpop.f32.mrf.mxu0
    %278 = vmatprep.mubr.f32.mxu0 0.0
    %279 = vmatmul.mubr.f32.gmra.mxu0 %v122
    %v280 = vpop.f32.mrf.mxu0
    %v281 = vadd.f32 0.0, %v280
    %v282 = vpop.f32.mrf.mxu0
    %283 = vmatprep.mubr.f32.mxu0 0.0
    %284 = vmatmul.mubr.f32.gmra.mxu0 %v123
    %v285 = vpop.f32.mrf.mxu0
    %v286 = vadd.f32 0.0, %v285
    %v287 = vpop.f32.mrf.mxu0
    %288 = vmatprep.mubr.f32.mxu0 0.0
    %289 = vmatmul.mubr.f32.gmra.mxu0 %v124
    %v290 = vpop.f32.mrf.mxu0
    %v291 = vadd.f32 0.0, %v290
    %v292 = vpop.f32.mrf.mxu0
    %293 = vmatprep.mubr.f32.mxu0 0.0
    %294 = vmatmul.mubr.f32.gmra.mxu0 %v125
    %v295 = vpop.f32.mrf.mxu0
    %v296 = vadd.f32 0.0, %v295
    %v297 = vpop.f32.mrf.mxu0
    %298 = vmatprep.mubr.f32.mxu0 0.0
    %299 = vmatmul.mubr.f32.gmra.mxu0 %v126
    %v300 = vpop.f32.mrf.mxu0
    %v301 = vadd.f32 0.0, %v300
    %v302 = vpop.f32.mrf.mxu0
    %303 = vdwg.mxu0
    %304 = vst [vmem:[#allocation9] sm:$0xff] %v226
    %305 = vst [vmem:[#allocation9 + $0x8] sm:$0xff] %v231
    %306 = vst [vmem:[#allocation9 + $0x10] sm:$0xff] %v236
    %307 = vst [vmem:[#allocation9 + $0x18] sm:$0xff] %v241
    %308 = vst [vmem:[#allocation9 + $0x20] sm:$0xff] %v246
    %309 = vst [vmem:[#allocation9 + $0x28] sm:$0xff] %v251
    %310 = vst [vmem:[#allocation9 + $0x30] sm:$0xff] %v256
    %311 = vst [vmem:[#allocation9 + $0x38] sm:$0xff] %v261
    %312 = vst [vmem:[#allocation9 + $0x40] sm:$0xff] %v266
    %313 = vst [vmem:[#allocation9 + $0x48] sm:$0xff] %v271
    %314 = vst [vmem:[#allocation9 + $0x50] sm:$0xff] %v276
    %315 = vst [vmem:[#allocation9 + $0x58] sm:$0xff] %v281
    %316 = vst [vmem:[#allocation9 + $0x60] sm:$0xff] %v286
    %317 = vst [vmem:[#allocation9 + $0x68] sm:$0xff] %v291
    %318 = vst [vmem:[#allocation9 + $0x70] sm:$0xff] %v296
    %319 = vst [vmem:[#allocation9 + $0x78] sm:$0xff] %v301
    %v320 = vld [vmem:[#allocation5] sm:$0xff]
    %v321 = vld [vmem:[#allocation5 + $0x8] sm:$0xff]
    %v322 = vld [vmem:[#allocation5 + $0x10] sm:$0xff]
    %v323 = vld [vmem:[#allocation5 + $0x18] sm:$0xff]
    %v324 = vld [vmem:[#allocation5 + $0x20] sm:$0xff]
    %v325 = vld [vmem:[#allocation5 + $0x28] sm:$0xff]
    %v326 = vld [vmem:[#allocation5 + $0x30] sm:$0xff]
    %v327 = vld [vmem:[#allocation5 + $0x38] sm:$0xff]
    %v328 = vld [vmem:[#allocation5 + $0x40] sm:$0xff]
    %v329 = vld [vmem:[#allocation5 + $0x48] sm:$0xff]
    %v330 = vld [vmem:[#allocation5 + $0x50] sm:$0xff]
    %v331 = vld [vmem:[#allocation5 + $0x58] sm:$0xff]
    %v332 = vld [vmem:[#allocation5 + $0x60] sm:$0xff]
    %v333 = vld [vmem:[#allocation5 + $0x68] sm:$0xff]
    %v334 = vld [vmem:[#allocation5 + $0x70] sm:$0xff]
    %v335 = vld [vmem:[#allocation5 + $0x78] sm:$0xff]
    %336 = vmatprep.subr.mxu0 0.0
    %337 = vmatpush1.msra.mxu0 %v126
    %338 = vmatprep.subr.mxu0 0.0
    %339 = vmatpush1.msra.mxu0 %v125
    %340 = vmatprep.subr.mxu0 0.0
    %341 = vmatpush1.msra.mxu0 %v124
    %342 = vmatprep.subr.mxu0 0.0
    %343 = vmatpush1.msra.mxu0 %v123
    %344 = vmatprep.subr.mxu0 0.0
    %345 = vmatpush1.msra.mxu0 %v122
    %346 = vmatprep.subr.mxu0 0.0
    %347 = vmatpush1.msra.mxu0 %v121
    %348 = vmatprep.subr.mxu0 0.0
    %349 = vmatpush1.msra.mxu0 %v120
    %350 = vmatprep.subr.mxu0 0.0
    %351 = vmatpush1.msra.mxu0 %v119
    %352 = vmatprep.subr.mxu0 0.0
    %353 = vmatpush1.msra.mxu0 %v118
    %354 = vmatprep.subr.mxu0 0.0
    %355 = vmatpush1.msra.mxu0 %v117
    %356 = vmatprep.subr.mxu0 0.0
    %357 = vmatpush1.msra.mxu0 %v116
    %358 = vmatprep.subr.mxu0 0.0
    %359 = vmatpush1.msra.mxu0 %v115
    %360 = vmatprep.subr.mxu0 0.0
    %361 = vmatpush1.msra.mxu0 %v114
    %362 = vmatprep.subr.mxu0 0.0
    %363 = vmatpush1.msra.mxu0 %v113
    %364 = vmatprep.subr.mxu0 0.0
    %365 = vmatpush1.msra.mxu0 %v112
    %366 = vmatprep.subr.mxu0 0.0
    %367 = vmatpush1.msra.mxu0 %v111
    %368 = vmatprep.subr.mxu0 0.0
    %369 = vmatpush2.msra.mxu0 0.0
    %370 = vmatprep.subr.mxu0 0.0
    %371 = vmatpush2.msra.mxu0 0.0
    %372 = vmatprep.subr.mxu0 0.0
    %373 = vmatpush2.msra.mxu0 0.0
    %374 = vmatprep.subr.mxu0 0.0
    %375 = vmatpush2.msra.mxu0 0.0
    %376 = vmatprep.subr.mxu0 0.0
    %377 = vmatpush2.msra.mxu0 0.0
    %378 = vmatprep.subr.mxu0 0.0
    %379 = vmatpush2.msra.mxu0 0.0
    %380 = vmatprep.subr.mxu0 0.0
    %381 = vmatpush2.msra.mxu0 0.0
    %382 = vmatprep.subr.mxu0 0.0
    %383 = vmatpush2.msra.mxu0 0.0
    %384 = vmatprep.subr.mxu0 0.0
    %385 = vmatpush2.msra.mxu0 0.0
    %386 = vmatprep.subr.mxu0 0.0
    %387 = vmatpush2.msra.mxu0 0.0
    %388 = vmatprep.subr.mxu0 0.0
    %389 = vmatpush2.msra.mxu0 0.0
    %390 = vmatprep.subr.mxu0 0.0
    %391 = vmatpush2.msra.mxu0 0.0
    %392 = vmatprep.subr.mxu0 0.0
    %393 = vmatpush2.msra.mxu0 0.0
    %394 = vmatprep.subr.mxu0 0.0
    %395 = vmatpush2.msra.mxu0 0.0
    %396 = vmatprep.subr.mxu0 0.0
    %397 = vmatpush2.msra.mxu0 0.0
    %398 = vmatprep.subr.mxu0 0.0
    %399 = vmatpush2.msra.mxu0 0.0
    %400 = vmatprep.mubr.f32.mxu0 0.0
    %401 = vmatmul.mubr.f32.gmra.mxu0 %v320
    %v402 = vpop.f32.mrf.mxu0
    %v403 = vadd.f32 0.0, %v402
    %v404 = vpop.f32.mrf.mxu0
    %405 = vmatprep.mubr.f32.mxu0 0.0
    %406 = vmatmul.mubr.f32.gmra.mxu0 %v321
    %v407 = vpop.f32.mrf.mxu0
    %v408 = vadd.f32 0.0, %v407
    %v409 = vpop.f32.mrf.mxu0
    %410 = vmatprep.mubr.f32.mxu0 0.0
    %411 = vmatmul.mubr.f32.gmra.mxu0 %v322
    %v412 = vpop.f32.mrf.mxu0
    %v413 = vadd.f32 0.0, %v412
    %v414 = vpop.f32.mrf.mxu0
    %415 = vmatprep.mubr.f32.mxu0 0.0
    %416 = vmatmul.mubr.f32.gmra.mxu0 %v323
    %v417 = vpop.f32.mrf.mxu0
    %v418 = vadd.f32 0.0, %v417
    %v419 = vpop.f32.mrf.mxu0
    %420 = vmatprep.mubr.f32.mxu0 0.0
    %421 = vmatmul.mubr.f32.gmra.mxu0 %v324
    %v422 = vpop.f32.mrf.mxu0
    %v423 = vadd.f32 0.0, %v422
    %v424 = vpop.f32.mrf.mxu0
    %425 = vmatprep.mubr.f32.mxu0 0.0
    %426 = vmatmul.mubr.f32.gmra.mxu0 %v325
    %v427 = vpop.f32.mrf.mxu0
    %v428 = vadd.f32 0.0, %v427
    %v429 = vpop.f32.mrf.mxu0
    %430 = vmatprep.mubr.f32.mxu0 0.0
    %431 = vmatmul.mubr.f32.gmra.mxu0 %v326
    %v432 = vpop.f32.mrf.mxu0
    %v433 = vadd.f32 0.0, %v432
    %v434 = vpop.f32.mrf.mxu0
    %435 = vmatprep.mubr.f32.mxu0 0.0
    %436 = vmatmul.mubr.f32.gmra.mxu0 %v327
    %v437 = vpop.f32.mrf.mxu0
    %v438 = vadd.f32 0.0, %v437
    %v439 = vpop.f32.mrf.mxu0
    %440 = vmatprep.mubr.f32.mxu0 0.0
    %441 = vmatmul.mubr.f32.gmra.mxu0 %v328
    %v442 = vpop.f32.mrf.mxu0
    %v443 = vadd.f32 0.0, %v442
    %v444 = vpop.f32.mrf.mxu0
    %445 = vmatprep.mubr.f32.mxu0 0.0
    %446 = vmatmul.mubr.f32.gmra.mxu0 %v329
    %v447 = vpop.f32.mrf.mxu0
    %v448 = vadd.f32 0.0, %v447
    %v449 = vpop.f32.mrf.mxu0
    %450 = vmatprep.mubr.f32.mxu0 0.0
    %451 = vmatmul.mubr.f32.gmra.mxu0 %v330
    %v452 = vpop.f32.mrf.mxu0
    %v453 = vadd.f32 0.0, %v452
    %v454 = vpop.f32.mrf.mxu0
    %455 = vmatprep.mubr.f32.mxu0 0.0
    %456 = vmatmul.mubr.f32.gmra.mxu0 %v331
    %v457 = vpop.f32.mrf.mxu0
    %v458 = vadd.f32 0.0, %v457
    %v459 = vpop.f32.mrf.mxu0
    %460 = vmatprep.mubr.f32.mxu0 0.0
    %461 = vmatmul.mubr.f32.gmra.mxu0 %v332
    %v462 = vpop.f32.mrf.mxu0
    %v463 = vadd.f32 0.0, %v462
    %v464 = vpop.f32.mrf.mxu0
    %465 = vmatprep.mubr.f32.mxu0 0.0
    %466 = vmatmul.mubr.f32.gmra.mxu0 %v333
    %v467 = vpop.f32.mrf.mxu0
    %v468 = vadd.f32 0.0, %v467
    %v469 = vpop.f32.mrf.mxu0
    %470 = vmatprep.mubr.f32.mxu0 0.0
    %471 = vmatmul.mubr.f32.gmra.mxu0 %v334
    %v472 = vpop.f32.mrf.mxu0
    %v473 = vadd.f32 0.0, %v472
    %v474 = vpop.f32.mrf.mxu0
    %475 = vmatprep.mubr.f32.mxu0 0.0
    %476 = vmatmul.mubr.f32.gmra.mxu0 %v335
    %v477 = vpop.f32.mrf.mxu0
    %v478 = vadd.f32 0.0, %v477
    %v479 = vpop.f32.mrf.mxu0
    %480 = vdwg.mxu0
    %481 = vst [vmem:[#allocation11] sm:$0xff] %v403
    %482 = vst [vmem:[#allocation11 + $0x8] sm:$0xff] %v408
    %483 = vst [vmem:[#allocation11 + $0x10] sm:$0xff] %v413
    %484 = vst [vmem:[#allocation11 + $0x18] sm:$0xff] %v418
    %485 = vst [vmem:[#allocation11 + $0x20] sm:$0xff] %v423
    %486 = vst [vmem:[#allocation11 + $0x28] sm:$0xff] %v428
    %487 = vst [vmem:[#allocation11 + $0x30] sm:$0xff] %v433
    %488 = vst [vmem:[#allocation11 + $0x38] sm:$0xff] %v438
    %489 = vst [vmem:[#allocation11 + $0x40] sm:$0xff] %v443
    %490 = vst [vmem:[#allocation11 + $0x48] sm:$0xff] %v448
    %491 = vst [vmem:[#allocation11 + $0x50] sm:$0xff] %v453
    %492 = vst [vmem:[#allocation11 + $0x58] sm:$0xff] %v458
    %493 = vst [vmem:[#allocation11 + $0x60] sm:$0xff] %v463
    %494 = vst [vmem:[#allocation11 + $0x68] sm:$0xff] %v468
    %495 = vst [vmem:[#allocation11 + $0x70] sm:$0xff] %v473
    %496 = vst [vmem:[#allocation11 + $0x78] sm:$0xff] %v478
    // Predicated region
    $region26: #{tpu_custom_call.1} parent=1 // pred_check
      _
    $region27: #{tpu_custom_call.1} parent=1 // pred_check_branch
      %498 = sbr.rel (0) target = $region29
    $region28: #{tpu_custom_call.1} parent=1 // pred_region
      %s500 = ssub.s32 2048, 2048
      %501 = vsyncadd [#allocation4], %s500
      %s502 = sshll.u32 [#allocation8], 4
      %s503 = int_to_ptr.vmem [resolvable:$true] %s502
      %508 = dma.vmem_to_hbm [thread:$0]  %s503, 2048, %s3, [#allocation4], 128, 128, 8
    $region29: #{tpu_custom_call.1} parent=1 // pred_fallthru
      _
    // Predicated region
    $region30: #{tpu_custom_call.1} parent=1 // pred_check
      _
    $region31: #{tpu_custom_call.1} parent=1 // pred_check_branch
      %510 = sbr.rel (0) target = $region33
    $region32: #{tpu_custom_call.1} parent=1 // pred_region
      %s512 = ssub.s32 2048, 2048
      %513 = vsyncadd [#allocation10], %s512
      %s514 = sshll.u32 [#allocation9], 4
      %s515 = int_to_ptr.vmem [resolvable:$true] %s514
      %520 = dma.vmem_to_hbm [thread:$0]  %s515, 2048, %s4, [#allocation10], 128, 128, 8
    $region33: #{tpu_custom_call.1} parent=1 // pred_fallthru
      _
    // Predicated region
    $region34: #{tpu_custom_call.1} parent=1 // pred_check
      _
    $region35: #{tpu_custom_call.1} parent=1 // pred_check_branch
      %522 = sbr.rel (0) target = $region37
    $region36: #{tpu_custom_call.1} parent=1 // pred_region
      %s524 = ssub.s32 2048, 2048
      %525 = vsyncadd [#allocation10], %s524
      %s526 = sshll.u32 [#allocation11], 4
      %s527 = int_to_ptr.vmem [resolvable:$true] %s526
      %532 = dma.vmem_to_hbm [thread:$0]  %s527, 2048, %s5, [#allocation10], 128, 128, 8
    $region37: #{tpu_custom_call.1} parent=1 // pred_fallthru
      _
    // Predicated region
    $region38: #{tpu_custom_call.1} parent=1 // pred_check
      _
    $region39: #{tpu_custom_call.1} parent=1 // pred_check_branch
      %534 = sbr.rel (0) target = $region41
    $region40: #{tpu_custom_call.1} parent=1 // pred_region
      %535 = dma.done [#allocation4], 2048
    $region41: #{tpu_custom_call.1} parent=1 // pred_fallthru
      _
    // Predicated region
    $region42: #{tpu_custom_call.1} parent=1 // pred_check
      _
    $region43: #{tpu_custom_call.1} parent=1 // pred_check_branch
      %537 = sbr.rel (0) target = $region45
    $region44: #{tpu_custom_call.1} parent=1 // pred_region
      %538 = dma.done [#allocation10], 2048
    $region45: #{tpu_custom_call.1} parent=1 // pred_fallthru
      _
    // Predicated region
    $region46: #{tpu_custom_call.1} parent=1 // pred_check
      _
    $region47: #{tpu_custom_call.1} parent=1 // pred_check_branch
      %540 = sbr.rel (0) target = $region49
    $region48: #{tpu_custom_call.1} parent=1 // pred_region
      %541 = dma.done [#allocation10], 2048
    $region49: #{tpu_custom_call.1} parent=1 // pred_fallthru
      _
    %542 = vsyncpa [#allocation3], 1
    %543 = vsyncpa [#allocation6], 1
    %544 = vsyncpa [#allocation4], 1
    %545 = vsyncpa [#allocation10], 1

</llo_original>
